<compile_context>
chip_gen: v6e
topology: v6e:2x2x1
jax: 0.10.0
libtpu: 0.0.40
codegen_flags: <defaults>
</compile_context>

<pallas_src>
import jax
import jax.numpy as jnp
from jax.experimental import pallas as pl
from jax.experimental.pallas import tpu as pltpu


def mlp_kernel(x_ref, w1_ref, b1_ref, w2_ref, b2_ref, w3_ref, b3_ref, o_ref):
    x = x_ref[...]                                                        # (TM, in) f32
    h1 = jnp.dot(x, w1_ref[...], preferred_element_type=jnp.float32) + b1_ref[...]
    h1 = jnp.maximum(h1, 0.0)
    h2 = jnp.dot(h1, w2_ref[...], preferred_element_type=jnp.float32) + b2_ref[...]
    h2 = jnp.maximum(h2, 0.0)
    out = jnp.dot(h2, w3_ref[...], preferred_element_type=jnp.float32) + b3_ref[...]
    o_ref[...] = out.astype(o_ref.dtype)                                  # (TM, num_classes)


def _round_up(a, m):
    return (a + m - 1) // m * m


def neural_net_forward(x, params, *, tm=None):
    """Forward pass of NeuralNet. x: (B, input_size) f32. Returns (B, num_classes) f32."""
    w1, b1, w2, b2, w3, b3 = params
    B, in_features = x.shape
    hidden = w1.shape[1]
    num_classes = w3.shape[1]

    if tm is None:
        # Aim for >= 2 grid steps (megacore / pipelining) while keeping the tile big enough
        # to amortize per-step overhead. Cap at 8192 rows (~1.2 MB double-buffered for these
        # feature dims) -> fits comfortably in scoped VMEM on v5e/v6e/v7x.
        tm = max(pl.cdiv(B, 2), 8)
    tm = int(min(max(_round_up(int(tm), 8), 8), 8192))
    grid = (pl.cdiv(B, tm),)   # partial final block is fine: no cross-row reduction,
                               # out-of-bounds output rows are never written back.

    flops = 2 * B * (in_features * hidden + hidden * hidden + hidden * num_classes)
    param_bytes = sum(int(p.size) for p in params) * 4
    bytes_accessed = (int(x.size) + B * num_classes) * 4 + param_bytes

    out = pl.pallas_call(
        mlp_kernel,
        out_shape=jax.ShapeDtypeStruct((B, num_classes), jnp.float32),
        grid_spec=pltpu.PrefetchScalarGridSpec(
            num_scalar_prefetch=0,
            grid=grid,
            in_specs=[
                pl.BlockSpec((tm, in_features), lambda i: (i, 0)),        # x: tiled over batch
                pl.BlockSpec((in_features, hidden), lambda i: (0, 0)),    # w1: resident
                pl.BlockSpec((1, hidden), lambda i: (0, 0)),              # b1: resident
                pl.BlockSpec((hidden, hidden), lambda i: (0, 0)),         # w2: resident
                pl.BlockSpec((1, hidden), lambda i: (0, 0)),              # b2: resident
                pl.BlockSpec((hidden, num_classes), lambda i: (0, 0)),    # w3: resident
                pl.BlockSpec((1, num_classes), lambda i: (0, 0)),         # b3: resident
            ],
            out_specs=pl.BlockSpec((tm, num_classes), lambda i: (i, 0)),
        ),
        compiler_params=pltpu.CompilerParams(
            dimension_semantics=("parallel",),          # batch tiles are independent
        ),
        cost_estimate=pl.CostEstimate(
            flops=flops, transcendentals=0, bytes_accessed=bytes_accessed),
    )(x, w1, b1, w2, b2, w3, b3)

    return out


def init_params(key, input_size, hidden_size, num_classes):
    """Deterministic init mimicking nn.Linear (uniform(-1/sqrt(fan_in), 1/sqrt(fan_in)))."""
    def linear(k, fan_in, fan_out):
        kw, kb = jax.random.split(k)
        bound = 1.0 / jnp.sqrt(jnp.float32(fan_in))
        w = jax.random.uniform(kw, (fan_in, fan_out), jnp.float32, -bound, bound)  # (in, out)
        b = jax.random.uniform(kb, (1, fan_out), jnp.float32, -bound, bound)
        return w, b

    k1, k2, k3 = jax.random.split(key, 3)
    w1, b1 = linear(k1, input_size, hidden_size)
    w2, b2 = linear(k2, hidden_size, hidden_size)
    w3, b3 = linear(k3, hidden_size, num_classes)
    return (w1, b1, w2, b2, w3, b3)


def reference_forward(x, params):
    """Pure-JAX f32 reference (same math as the PyTorch module)."""
    w1, b1, w2, b2, w3, b3 = params
    h1 = jnp.maximum(jnp.dot(x, w1) + b1, 0.0)
    h2 = jnp.maximum(jnp.dot(h1, w2) + b2, 0.0)
    return jnp.dot(h2, w3) + b3


if __name__ == "__main__":
    # Small shapes consistent with the module: bag-of-words vocab=32, hidden=8, classes=4.
    input_size = 32
    hidden_size = 8
    num_classes = 4

    key = jax.random.PRNGKey(0)
    kx, kp, kx2 = jax.random.split(key, 3)
    params = init_params(kp, input_size, hidden_size, num_classes)

    # Case 1: tiny batch, single grid step.
    batch = 8
    x = jax.random.uniform(kx, (batch, input_size), jnp.float32)
    out = jax.block_until_ready(neural_net_forward(x, params))
    ref = reference_forward(x, params)
    assert out.shape == (batch, num_classes)
    assert jnp.allclose(out, ref, atol=1e-2, rtol=1e-2)

    # Case 2: batch not a multiple of the tile -> multi-step grid + partial final block.
    batch2 = 37
    x2 = jax.random.uniform(kx2, (batch2, input_size), jnp.float32)
    out2 = jax.block_until_ready(neural_net_forward(x2, params))          # auto tm -> 2 steps
    ref2 = reference_forward(x2, params)
    assert out2.shape == (batch2, num_classes)
    assert jnp.allclose(out2, ref2, atol=1e-2, rtol=1e-2)

    # Case 3: explicit small tile -> 3 grid steps (exercises pipelining path).
    out3 = jax.block_until_ready(neural_net_forward(x2, params, tm=16))
    assert out3.shape == (batch2, num_classes)
    assert jnp.allclose(out3, ref2, atol=1e-2, rtol=1e-2)

    print("KERNEL_OK")
</pallas_src>

<mosaic_0001>
module attributes {stable_mosaic.version = 11 : i64} {
  func.func @mlp_kernel(%arg0: i32, %arg1: memref<8x32xf32, #tpu.memory_space<vmem>>, %arg2: memref<32x8xf32, #tpu.memory_space<vmem>>, %arg3: memref<1x8xf32, #tpu.memory_space<vmem>>, %arg4: memref<8x8xf32, #tpu.memory_space<vmem>>, %arg5: memref<1x8xf32, #tpu.memory_space<vmem>>, %arg6: memref<8x4xf32, #tpu.memory_space<vmem>>, %arg7: memref<1x4xf32, #tpu.memory_space<vmem>>, %arg8: memref<8x4xf32, #tpu.memory_space<vmem>>) attributes {dimension_semantics = [#tpu.dimension_semantics<parallel>], iteration_bounds = array<i64: 1>, scalar_prefetch = 0 : i64, scratch_operands = 0 : i64, tpu.core_type = #tpu.core_type<tc>, window_params = [{transform_indices = @transform_0, window_bounds = array<i64: 8, 32>}, {pipeline_mode = #tpu.pipeline_mode<synchronous>, transform_indices = @transform_1, window_bounds = array<i64: 32, 8>}, {pipeline_mode = #tpu.pipeline_mode<synchronous>, transform_indices = @transform_2, window_bounds = array<i64: 1, 8>}, {pipeline_mode = #tpu.pipeline_mode<synchronous>, transform_indices = @transform_3, window_bounds = array<i64: 8, 8>}, {pipeline_mode = #tpu.pipeline_mode<synchronous>, transform_indices = @transform_4, window_bounds = array<i64: 1, 8>}, {pipeline_mode = #tpu.pipeline_mode<synchronous>, transform_indices = @transform_5, window_bounds = array<i64: 8, 4>}, {pipeline_mode = #tpu.pipeline_mode<synchronous>, transform_indices = @transform_6, window_bounds = array<i64: 1, 4>}, {transform_indices = @transform_7, window_bounds = array<i64: 8, 4>}]} {
    %c0 = arith.constant 0 : index
    %c0_0 = arith.constant 0 : index
    %0 = vector.load %arg1[%c0, %c0_0] : memref<8x32xf32, #tpu.memory_space<vmem>>, vector<8x32xf32>
    %c0_1 = arith.constant 0 : index
    %c0_2 = arith.constant 0 : index
    %1 = vector.load %arg2[%c0_1, %c0_2] : memref<32x8xf32, #tpu.memory_space<vmem>>, vector<32x8xf32>
    %cst = arith.constant dense<0.000000e+00> : vector<8x8xf32>
    %2 = tpu.matmul %0, %1, %cst {dimension_numbers = #tpu.dot_dimension_numbers<[1], [0], [0], [1], [0, 0, 1, 1], [], []>} : vector<8x32xf32>, vector<32x8xf32>, vector<8x8xf32> -> vector<8x8xf32>
    %c0_3 = arith.constant 0 : index
    %c0_4 = arith.constant 0 : index
    %3 = vector.load %arg3[%c0_3, %c0_4] : memref<1x8xf32, #tpu.memory_space<vmem>>, vector<1x8xf32>
    %4 = vector.broadcast %3 : vector<1x8xf32> to vector<8x8xf32>
    %5 = arith.addf %2, %4 : vector<8x8xf32>
    %cst_5 = arith.constant 0.000000e+00 : f32
    %6 = vector.broadcast %cst_5 : f32 to vector<8x8xf32>
    %7 = arith.maximumf %5, %6 : vector<8x8xf32>
    %c0_6 = arith.constant 0 : index
    %c0_7 = arith.constant 0 : index
    %8 = vector.load %arg4[%c0_6, %c0_7] : memref<8x8xf32, #tpu.memory_space<vmem>>, vector<8x8xf32>
    %cst_8 = arith.constant dense<0.000000e+00> : vector<8x8xf32>
    %9 = tpu.matmul %7, %8, %cst_8 {dimension_numbers = #tpu.dot_dimension_numbers<[1], [0], [0], [1], [0, 0, 1, 1], [], []>} : vector<8x8xf32>, vector<8x8xf32>, vector<8x8xf32> -> vector<8x8xf32>
    %c0_9 = arith.constant 0 : index
    %c0_10 = arith.constant 0 : index
    %10 = vector.load %arg5[%c0_9, %c0_10] : memref<1x8xf32, #tpu.memory_space<vmem>>, vector<1x8xf32>
    %11 = vector.broadcast %10 : vector<1x8xf32> to vector<8x8xf32>
    %12 = arith.addf %9, %11 : vector<8x8xf32>
    %cst_11 = arith.constant 0.000000e+00 : f32
    %13 = vector.broadcast %cst_11 : f32 to vector<8x8xf32>
    %14 = arith.maximumf %12, %13 : vector<8x8xf32>
    %c0_12 = arith.constant 0 : index
    %c0_13 = arith.constant 0 : index
    %15 = vector.load %arg6[%c0_12, %c0_13] : memref<8x4xf32, #tpu.memory_space<vmem>>, vector<8x4xf32>
    %cst_14 = arith.constant dense<0.000000e+00> : vector<8x4xf32>
    %16 = tpu.matmul %14, %15, %cst_14 {dimension_numbers = #tpu.dot_dimension_numbers<[1], [0], [0], [1], [0, 0, 1, 1], [], []>} : vector<8x8xf32>, vector<8x4xf32>, vector<8x4xf32> -> vector<8x4xf32>
    %c0_15 = arith.constant 0 : index
    %c0_16 = arith.constant 0 : index
    %17 = vector.load %arg7[%c0_15, %c0_16] : memref<1x4xf32, #tpu.memory_space<vmem>>, vector<1x4xf32>
    %18 = vector.broadcast %17 : vector<1x4xf32> to vector<8x4xf32>
    %19 = arith.addf %16, %18 : vector<8x4xf32>
    %c0_17 = arith.constant 0 : index
    %c0_18 = arith.constant 0 : index
    %20 = vector.load %arg8[%c0_17, %c0_18] : memref<8x4xf32, #tpu.memory_space<vmem>>, vector<8x4xf32>
    tpu.vector_store %arg8[%c0_17, %c0_18], %19 {strides = array<i32>} : memref<8x4xf32, #tpu.memory_space<vmem>>, vector<8x4xf32>,
    return
  }
  func.func @transform_0(%arg0: i32) -> (i32, i32) {
    %c0_i32 = arith.constant 0 : i32
    %c0_i32_0 = arith.constant 0 : i32
    return %arg0, %c0_i32 : i32, i32
  }
  func.func @transform_1(%arg0: i32) -> (i32, i32) {
    %c0_i32 = arith.constant 0 : i32
    %c0_i32_0 = arith.constant 0 : i32
    %c0_i32_1 = arith.constant 0 : i32
    return %c0_i32, %c0_i32_0 : i32, i32
  }
  func.func @transform_2(%arg0: i32) -> (i32, i32) {
    %c0_i32 = arith.constant 0 : i32
    %c0_i32_0 = arith.constant 0 : i32
    %c0_i32_1 = arith.constant 0 : i32
    return %c0_i32, %c0_i32_0 : i32, i32
  }
  func.func @transform_3(%arg0: i32) -> (i32, i32) {
    %c0_i32 = arith.constant 0 : i32
    %c0_i32_0 = arith.constant 0 : i32
    %c0_i32_1 = arith.constant 0 : i32
    return %c0_i32, %c0_i32_0 : i32, i32
  }
  func.func @transform_4(%arg0: i32) -> (i32, i32) {
    %c0_i32 = arith.constant 0 : i32
    %c0_i32_0 = arith.constant 0 : i32
    %c0_i32_1 = arith.constant 0 : i32
    return %c0_i32, %c0_i32_0 : i32, i32
  }
  func.func @transform_5(%arg0: i32) -> (i32, i32) {
    %c0_i32 = arith.constant 0 : i32
    %c0_i32_0 = arith.constant 0 : i32
    %c0_i32_1 = arith.constant 0 : i32
    return %c0_i32, %c0_i32_0 : i32, i32
  }
  func.func @transform_6(%arg0: i32) -> (i32, i32) {
    %c0_i32 = arith.constant 0 : i32
    %c0_i32_0 = arith.constant 0 : i32
    %c0_i32_1 = arith.constant 0 : i32
    return %c0_i32, %c0_i32_0 : i32, i32
  }
  func.func @transform_7(%arg0: i32) -> (i32, i32) {
    %c0_i32 = arith.constant 0 : i32
    %c0_i32_0 = arith.constant 0 : i32
    return %arg0, %c0_i32 : i32, i32
  }
}

</mosaic_0001>

<llo_original>
// kernel: tpu_custom_call.1
$region0: #{tpu_custom_call.1}
  #allocation0 [shape = 'u32[]', space=smem, size = 0x4, offset = 0x4, fixed_abs, tag = 'smem constant byte address 0x4 - core index']
  #allocation1 [shape = 'u32[144,128]{1,0:T(1,128)}', space=vmem, size = 0x12000, scoped, tag = 'internal scratch']
  %s0 = inlined_call_operand.vmem [shape: f32[8,32], index: 0, kind: input, shape index: {}]
  %s1 = inlined_call_operand.vmem [shape: f32[32,8], index: 1, kind: input, shape index: {}]
  %s2 = inlined_call_operand.vmem [shape: f32[1,8], index: 2, kind: input, shape index: {}]
  %s3 = inlined_call_operand.vmem [shape: f32[8,8], index: 3, kind: input, shape index: {}]
  %s4 = inlined_call_operand.vmem [shape: f32[1,8], index: 4, kind: input, shape index: {}]
  %s5 = inlined_call_operand.vmem [shape: f32[8,4], index: 5, kind: input, shape index: {}]
  %s6 = inlined_call_operand.vmem [shape: f32[1,4], index: 6, kind: input, shape index: {}]
  %s7 = inlined_call_operand.vmem [shape: f32[8,4], index: 7, kind: output, shape index: {}]
  %s8 = sld [smem:[#allocation0]]
  $region38: #{tpu_custom_call.1} parent=0
    _
  %s10 = ssub.s32 1, %s8
  %s11 = scalar_select 0, %s10, %s8
  // Predicated region
  $region2: #{tpu_custom_call.1} parent=0 // pred_check
    _
  $region3: #{tpu_custom_call.1} parent=0 // pred_check_branch
    %13 = sbr.rel (0) target = $region5
  $region4: #{tpu_custom_call.1} parent=0 // pred_region
    _
  $region5: #{tpu_custom_call.1} parent=0 // pred_fallthru
    _
  // Predicated region
  $region6: #{tpu_custom_call.1} parent=0 // pred_check
    _
  $region7: #{tpu_custom_call.1} parent=0 // pred_check_branch
    %15 = sbr.rel (0) target = $region9
  $region8: #{tpu_custom_call.1} parent=0 // pred_region
    _
  $region9: #{tpu_custom_call.1} parent=0 // pred_fallthru
    _
  // Predicated region
  $region10: #{tpu_custom_call.1} parent=0 // pred_check
    _
  $region11: #{tpu_custom_call.1} parent=0 // pred_check_branch
    %17 = sbr.rel (0) target = $region13
  $region12: #{tpu_custom_call.1} parent=0 // pred_region
    _
  $region13: #{tpu_custom_call.1} parent=0 // pred_fallthru
    _
  // Predicated region
  $region14: #{tpu_custom_call.1} parent=0 // pred_check
    _
  $region15: #{tpu_custom_call.1} parent=0 // pred_check_branch
    %19 = sbr.rel (0) target = $region17
  $region16: #{tpu_custom_call.1} parent=0 // pred_region
    _
  $region17: #{tpu_custom_call.1} parent=0 // pred_fallthru
    _
  // Predicated region
  $region18: #{tpu_custom_call.1} parent=0 // pred_check
    _
  $region19: #{tpu_custom_call.1} parent=0 // pred_check_branch
    %21 = sbr.rel (0) target = $region21
  $region20: #{tpu_custom_call.1} parent=0 // pred_region
    _
  $region21: #{tpu_custom_call.1} parent=0 // pred_fallthru
    _
  // Predicated region
  $region22: #{tpu_custom_call.1} parent=0 // pred_check
    _
  $region23: #{tpu_custom_call.1} parent=0 // pred_check_branch
    %23 = sbr.rel (0) target = $region25
  $region24: #{tpu_custom_call.1} parent=0 // pred_region
    _
  $region25: #{tpu_custom_call.1} parent=0 // pred_fallthru
    _
  // Predicated region
  $region26: #{tpu_custom_call.1} parent=0 // pred_check
    _
  $region27: #{tpu_custom_call.1} parent=0 // pred_check_branch
    %25 = sbr.rel (0) target = $region29
  $region28: #{tpu_custom_call.1} parent=0 // pred_region
    _
  $region29: #{tpu_custom_call.1} parent=0 // pred_fallthru
    _
  %v26 = vld [vmem:[%s0] sm:$0xff]
  %v27 = vld [vmem:[%s1] sm:$0xff]
  %v28 = vld [vmem:[%s1 + $0x8] sm:$0xff]
  %v29 = vld [vmem:[%s1 + $0x10] sm:$0xff]
  %v30 = vld [vmem:[%s1 + $0x18] sm:$0xff]
  %v31 = vld [vmem:[%s2] sm:$0x1]
  %v33 = vlaneseq
  %v34 = vshrl.u32 %v33, 7
  %v35 = vsub.s32 0, %v34
  %v36 = vrot.slane %v31, %v35
  %vm38 = vcmask 261120
  %v40 = vsel %vm38, %v26, 0
  %42 = vmatprep.subr.mxu0 0.0
  %43 = vmatpush1.msra.mxu0 0.0
  %44 = vmatprep.subr.mxu0 0.0
  %45 = vmatpush1.msra.mxu0 0.0
  %46 = vmatprep.subr.mxu0 0.0
  %47 = vmatpush1.msra.mxu0 0.0
  %48 = vmatprep.subr.mxu0 0.0
  %49 = vmatpush1.msra.mxu0 0.0
  %50 = vmatprep.subr.mxu0 0.0
  %51 = vmatpush1.msra.mxu0 0.0
  %52 = vmatprep.subr.mxu0 0.0
  %53 = vmatpush1.msra.mxu0 0.0
  %54 = vmatprep.subr.mxu0 0.0
  %55 = vmatpush1.msra.mxu0 0.0
  %56 = vmatprep.subr.mxu0 0.0
  %57 = vmatpush1.msra.mxu0 0.0
  %58 = vmatprep.subr.mxu0 0.0
  %59 = vmatpush1.msra.mxu0 0.0
  %60 = vmatprep.subr.mxu0 0.0
  %61 = vmatpush1.msra.mxu0 0.0
  %62 = vmatprep.subr.mxu0 0.0
  %63 = vmatpush1.msra.mxu0 0.0
  %64 = vmatprep.subr.mxu0 0.0
  %65 = vmatpush1.msra.mxu0 0.0
  %66 = vmatprep.subr.mxu0 0.0
  %67 = vmatpush1.msra.mxu0 %v30
  %68 = vmatprep.subr.mxu0 0.0
  %69 = vmatpush1.msra.mxu0 %v29
  %70 = vmatprep.subr.mxu0 0.0
  %71 = vmatpush1.msra.mxu0 %v28
  %72 = vmatprep.subr.mxu0 0.0
  %73 = vmatpush1.msra.mxu0 %v27
  %74 = vmatprep.subr.mxu0 0.0
  %75 = vmatpush2.msra.mxu0 0.0
  %76 = vmatprep.subr.mxu0 0.0
  %77 = vmatpush2.msra.mxu0 0.0
  %78 = vmatprep.subr.mxu0 0.0
  %79 = vmatpush2.msra.mxu0 0.0
  %80 = vmatprep.subr.mxu0 0.0
  %81 = vmatpush2.msra.mxu0 0.0
  %82 = vmatprep.subr.mxu0 0.0
  %83 = vmatpush2.msra.mxu0 0.0
  %84 = vmatprep.subr.mxu0 0.0
  %85 = vmatpush2.msra.mxu0 0.0
  %86 = vmatprep.subr.mxu0 0.0
  %87 = vmatpush2.msra.mxu0 0.0
  %88 = vmatprep.subr.mxu0 0.0
  %89 = vmatpush2.msra.mxu0 0.0
  %90 = vmatprep.subr.mxu0 0.0
  %91 = vmatpush2.msra.mxu0 0.0
  %92 = vmatprep.subr.mxu0 0.0
  %93 = vmatpush2.msra.mxu0 0.0
  %94 = vmatprep.subr.mxu0 0.0
  %95 = vmatpush2.msra.mxu0 0.0
  %96 = vmatprep.subr.mxu0 0.0
  %97 = vmatpush2.msra.mxu0 0.0
  %98 = vmatprep.subr.mxu0 0.0
  %99 = vmatpush2.msra.mxu0 0.0
  %100 = vmatprep.subr.mxu0 0.0
  %101 = vmatpush2.msra.mxu0 0.0
  %102 = vmatprep.subr.mxu0 0.0
  %103 = vmatpush2.msra.mxu0 0.0
  %104 = vmatprep.subr.mxu0 0.0
  %105 = vmatpush2.msra.mxu0 0.0
  %106 = vmatprep.mubr.f32.mxu0 0.0
  %107 = vmatmul.mubr.f32.gmra.mxu0 %v40
  %v108 = vpop.f32.mrf.mxu0
  %v109 = vadd.f32 %v36, %v108
  %v110 = vpop.f32.mrf.mxu0
  %111 = vdwg.mxu0
  %v112 = vmax.f32 %v109, 0.0
  %v113 = vld [vmem:[%s3] sm:$0xff]
  %v114 = vld [vmem:[%s4] sm:$0x1]
  %v116 = vlaneseq
  %v117 = vshrl.u32 %v116, 7
  %v118 = vsub.s32 0, %v117
  %v119 = vrot.slane %v114, %v118
  %vm121 = vcmask 64512
  %v123 = vsel %vm121, %v112, 0
  %125 = vmatprep.subr.mxu0 0.0
  %126 = vmatpush1.msra.mxu0 0.0
  %127 = vmatprep.subr.mxu0 0.0
  %128 = vmatpush1.msra.mxu0 0.0
  %129 = vmatprep.subr.mxu0 0.0
  %130 = vmatpush1.msra.mxu0 0.0
  %131 = vmatprep.subr.mxu0 0.0
  %132 = vmatpush1.msra.mxu0 0.0
  %133 = vmatprep.subr.mxu0 0.0
  %134 = vmatpush1.msra.mxu0 0.0
  %135 = vmatprep.subr.mxu0 0.0
  %136 = vmatpush1.msra.mxu0 0.0
  %137 = vmatprep.subr.mxu0 0.0
  %138 = vmatpush1.msra.mxu0 0.0
  %139 = vmatprep.subr.mxu0 0.0
  %140 = vmatpush1.msra.mxu0 0.0
  %141 = vmatprep.subr.mxu0 0.0
  %142 = vmatpush1.msra.mxu0 0.0
  %143 = vmatprep.subr.mxu0 0.0
  %144 = vmatpush1.msra.mxu0 0.0
  %145 = vmatprep.subr.mxu0 0.0
  %146 = vmatpush1.msra.mxu0 0.0
  %147 = vmatprep.subr.mxu0 0.0
  %148 = vmatpush1.msra.mxu0 0.0
  %149 = vmatprep.subr.mxu0 0.0
  %150 = vmatpush1.msra.mxu0 0.0
  %151 = vmatprep.subr.mxu0 0.0
  %152 = vmatpush1.msra.mxu0 0.0
  %153 = vmatprep.subr.mxu0 0.0
  %154 = vmatpush1.msra.mxu0 0.0
  %155 = vmatprep.subr.mxu0 0.0
  %156 = vmatpush1.msra.mxu0 %v113
  %157 = vmatprep.subr.mxu0 0.0
  %158 = vmatpush2.msra.mxu0 0.0
  %159 = vmatprep.subr.mxu0 0.0
  %160 = vmatpush2.msra.mxu0 0.0
  %161 = vmatprep.subr.mxu0 0.0
  %162 = vmatpush2.msra.mxu0 0.0
  %163 = vmatprep.subr.mxu0 0.0
  %164 = vmatpush2.msra.mxu0 0.0
  %165 = vmatprep.subr.mxu0 0.0
  %166 = vmatpush2.msra.mxu0 0.0
  %167 = vmatprep.subr.mxu0 0.0
  %168 = vmatpush2.msra.mxu0 0.0
  %169 = vmatprep.subr.mxu0 0.0
  %170 = vmatpush2.msra.mxu0 0.0
  %171 = vmatprep.subr.mxu0 0.0
  %172 = vmatpush2.msra.mxu0 0.0
  %173 = vmatprep.subr.mxu0 0.0
  %174 = vmatpush2.msra.mxu0 0.0
  %175 = vmatprep.subr.mxu0 0.0
  %176 = vmatpush2.msra.mxu0 0.0
  %177 = vmatprep.subr.mxu0 0.0
  %178 = vmatpush2.msra.mxu0 0.0
  %179 = vmatprep.subr.mxu0 0.0
  %180 = vmatpush2.msra.mxu0 0.0
  %181 = vmatprep.subr.mxu0 0.0
  %182 = vmatpush2.msra.mxu0 0.0
  %183 = vmatprep.subr.mxu0 0.0
  %184 = vmatpush2.msra.mxu0 0.0
  %185 = vmatprep.subr.mxu0 0.0
  %186 = vmatpush2.msra.mxu0 0.0
  %187 = vmatprep.subr.mxu0 0.0
  %188 = vmatpush2.msra.mxu0 0.0
  %189 = vmatprep.mubr.f32.mxu0 0.0
  %190 = vmatmul.mubr.f32.gmra.mxu0 %v123
  %v191 = vpop.f32.mrf.mxu0
  %v192 = vadd.f32 %v119, %v191
  %v193 = vpop.f32.mrf.mxu0
  %194 = vdwg.mxu0
  %v195 = vmax.f32 %v192, 0.0
  %v196 = vld [vmem:[%s5] sm:$0xff]
  %v197 = vld [vmem:[%s6] sm:$0x1]
  %v199 = vlaneseq
  %v200 = vshrl.u32 %v199, 7
  %v201 = vsub.s32 0, %v200
  %v202 = vrot.slane %v197, %v201
  %v205 = vsel %vm121, %v195, 0
  %207 = vmatprep.subr.mxu0 0.0
  %208 = vmatpush1.msra.mxu0 0.0
  %209 = vmatprep.subr.mxu0 0.0
  %210 = vmatpush1.msra.mxu0 0.0
  %211 = vmatprep.subr.mxu0 0.0
  %212 = vmatpush1.msra.mxu0 0.0
  %213 = vmatprep.subr.mxu0 0.0
  %214 = vmatpush1.msra.mxu0 0.0
  %215 = vmatprep.subr.mxu0 0.0
  %216 = vmatpush1.msra.mxu0 0.0
  %217 = vmatprep.subr.mxu0 0.0
  %218 = vmatpush1.msra.mxu0 0.0
  %219 = vmatprep.subr.mxu0 0.0
  %220 = vmatpush1.msra.mxu0 0.0
  %221 = vmatprep.subr.mxu0 0.0
  %222 = vmatpush1.msra.mxu0 0.0
  %223 = vmatprep.subr.mxu0 0.0
  %224 = vmatpush1.msra.mxu0 0.0
  %225 = vmatprep.subr.mxu0 0.0
  %226 = vmatpush1.msra.mxu0 0.0
  %227 = vmatprep.subr.mxu0 0.0
  %228 = vmatpush1.msra.mxu0 0.0
  %229 = vmatprep.subr.mxu0 0.0
  %230 = vmatpush1.msra.mxu0 0.0
  %231 = vmatprep.subr.mxu0 0.0
  %232 = vmatpush1.msra.mxu0 0.0
  %233 = vmatprep.subr.mxu0 0.0
  %234 = vmatpush1.msra.mxu0 0.0
  %235 = vmatprep.subr.mxu0 0.0
  %236 = vmatpush1.msra.mxu0 0.0
  %237 = vmatprep.subr.mxu0 0.0
  %238 = vmatpush1.msra.mxu0 %v196
  %239 = vmatprep.subr.mxu0 0.0
  %240 = vmatpush2.msra.mxu0 0.0
  %241 = vmatprep.subr.mxu0 0.0
  %242 = vmatpush2.msra.mxu0 0.0
  %243 = vmatprep.subr.mxu0 0.0
  %244 = vmatpush2.msra.mxu0 0.0
  %245 = vmatprep.subr.mxu0 0.0
  %246 = vmatpush2.msra.mxu0 0.0
  %247 = vmatprep.subr.mxu0 0.0
  %248 = vmatpush2.msra.mxu0 0.0
  %249 = vmatprep.subr.mxu0 0.0
  %250 = vmatpush2.msra.mxu0 0.0
  %251 = vmatprep.subr.mxu0 0.0
  %252 = vmatpush2.msra.mxu0 0.0
  %253 = vmatprep.subr.mxu0 0.0
  %254 = vmatpush2.msra.mxu0 0.0
  %255 = vmatprep.subr.mxu0 0.0
  %256 = vmatpush2.msra.mxu0 0.0
  %257 = vmatprep.subr.mxu0 0.0
  %258 = vmatpush2.msra.mxu0 0.0
  %259 = vmatprep.subr.mxu0 0.0
  %260 = vmatpush2.msra.mxu0 0.0
  %261 = vmatprep.subr.mxu0 0.0
  %262 = vmatpush2.msra.mxu0 0.0
  %263 = vmatprep.subr.mxu0 0.0
  %264 = vmatpush2.msra.mxu0 0.0
  %265 = vmatprep.subr.mxu0 0.0
  %266 = vmatpush2.msra.mxu0 0.0
  %267 = vmatprep.subr.mxu0 0.0
  %268 = vmatpush2.msra.mxu0 0.0
  %269 = vmatprep.subr.mxu0 0.0
  %270 = vmatpush2.msra.mxu0 0.0
  %271 = vmatprep.mubr.f32.mxu0 0.0
  %272 = vmatmul.mubr.f32.gmra.mxu0 %v205
  %v273 = vpop.f32.mrf.mxu0
  %v274 = vadd.f32 %v202, %v273
  %v275 = vpop.f32.mrf.mxu0
  %276 = vdwg.mxu0
  %vm277 = vcmask 31744
  %278 = vst.msk [vmem:[%s7] sm:$0xff] %vm277, %v274
  // Predicated region
  $region30: #{tpu_custom_call.1} parent=0 // pred_check
    _
  $region31: #{tpu_custom_call.1} parent=0 // pred_check_branch
    %280 = sbr.rel (0) target = $region33
  $region32: #{tpu_custom_call.1} parent=0 // pred_region
    _
  $region33: #{tpu_custom_call.1} parent=0 // pred_fallthru
    _
  // Predicated region
  $region34: #{tpu_custom_call.1} parent=0 // pred_check
    _
  $region35: #{tpu_custom_call.1} parent=0 // pred_check_branch
    %282 = sbr.rel (0) target = $region37
  $region36: #{tpu_custom_call.1} parent=0 // pred_region
    _
  $region37: #{tpu_custom_call.1} parent=0 // pred_fallthru
    _

</llo_original>
